<compile_context>
chip_gen: v7x
topology: tpu7x:2x2x1
jax: 0.10.0
libtpu: 0.0.40
codegen_flags: <defaults>
</compile_context>

<pallas_src>
import math
from functools import partial

import jax
import jax.numpy as jnp
from jax.experimental import pallas as pl
from jax.experimental.pallas import tpu as pltpu

EPS_SAFE = 1e-12   # safe_norm epsilon
EPS_LN = 1e-5      # nn.LayerNorm default epsilon

TILE_N_MAX = 1024  # rows per grid step; ~0.35 KB/row live -> far under VMEM on v5e/v6e/v7x


def _round_up(x, m):
    return ((x + m - 1) // m) * m


def _gvp_ff_kernel(norm_scale, sqrt_vin,
                   s_ref, c_ref, gamma_ref, beta_ref,
                   wcomb_ref, wss_ref, wsv_ref, bs_ref,
                   s_out_ref, c_out_ref):
    """One row tile.  Lane-dense layout: rows on the 128-lane axis, channels on sublanes.

    s_ref     : (s_in, T)       scalar features
    c_ref     : (3, v_in, T)    coord features, xyz leading
    gamma/beta: (s_in, 1)       LayerNorm affine params
    wcomb_ref : (2*v_h, v_in)   fused vector weights [Wh ; Wu @ Wh]
    wss_ref   : (s_h, s_in)     scalar projection acting on s_ln
    wsv_ref   : (s_h, v_h)      scalar projection acting on ||Vh||
    bs_ref    : (s_h, 1)        scalar bias
    s_out_ref : (s_h, T)
    c_out_ref : (3, v_h, T)
    """
    v_h = c_out_ref.shape[1]

    # ---- scalar LayerNorm (reduce over the channel / sublane axis) ---------
    s = s_ref[...]
    mean = jnp.mean(s, axis=0, keepdims=True)
    cen = s - mean
    var = jnp.mean(cen * cen, axis=0, keepdims=True)
    s_ln = cen * jax.lax.rsqrt(var + EPS_LN) * gamma_ref[...] + beta_ref[...]

    # ---- coord normalization scale (per row) --------------------------------
    cx = c_ref[0]                                                # (v_in, T)
    cy = c_ref[1]
    cz = c_ref[2]
    ch_norm = jnp.sqrt(cx * cx + cy * cy + cz * cz + EPS_SAFE)   # safe_norm per channel
    denom = jnp.sum(ch_norm, axis=0, keepdims=True)              # (1, T)
    # EUP reciprocal instead of a VPU divide (approx=True would move it fully off the
    # critical VALU slots at ~1e-3 relative accuracy; kept exact here for fidelity).
    scale = sqrt_vin * pl.reciprocal(denom, approx=False)        # (1, T)

    # ---- fused vector projections: one matmul per xyz component -------------
    # W_comb = [Wh ; Wu @ Wh]; the per-row scale commutes with the channel-wise linear
    # maps, so the raw coords go straight to the MXU and scale is applied afterwards.
    wcomb = wcomb_ref[...]
    ox = jnp.dot(wcomb, cx, preferred_element_type=jnp.float32) * scale   # (2*v_h, T)
    oy = jnp.dot(wcomb, cy, preferred_element_type=jnp.float32) * scale
    oz = jnp.dot(wcomb, cz, preferred_element_type=jnp.float32) * scale
    vhx, vux = ox[:v_h], ox[v_h:]
    vhy, vuy = oy[:v_h], oy[v_h:]
    vhz, vuz = oz[:v_h], oz[v_h:]

    vh_norm = norm_scale * jnp.sqrt(vhx * vhx + vhy * vhy + vhz * vhz + EPS_SAFE)

    # ---- scalar projection on concat(s_ln, ||Vh||)  (weights pre-split on host) ----
    scalar_out = (jnp.dot(wss_ref[...], s_ln, preferred_element_type=jnp.float32)
                  + jnp.dot(wsv_ref[...], vh_norm, preferred_element_type=jnp.float32)
                  + bs_ref[...])
    s_out_ref[...] = jnp.maximum(scalar_out, 0.0).astype(s_out_ref.dtype)

    # ---- vector gating: phase = safe_norm(Vu) >= 0, so ReLU(phase) == phase ----
    phase = jnp.sqrt(vux * vux + vuy * vuy + vuz * vuz + EPS_SAFE)
    c_out_ref[0] = (phase * vux).astype(c_out_ref.dtype)
    c_out_ref[1] = (phase * vuy).astype(c_out_ref.dtype)
    c_out_ref[2] = (phase * vuz).astype(c_out_ref.dtype)


def init_params(key, dim_in, dim_out=None):
    """Deterministic synthetic parameters matching GVPFeedForwardBlock.__init__ shapes."""
    dim_out = dim_out if dim_out is not None else dim_in
    s_in, v_in = dim_in
    s_h = max(dim_in[0], dim_out[0])
    v_h = max(dim_in[1], dim_out[1])
    k1, k2, k3, k4 = jax.random.split(key, 4)
    gamma = jnp.ones((s_in,), jnp.float32)           # LayerNorm weight
    beta = jnp.zeros((s_in,), jnp.float32)           # LayerNorm bias
    wh = jax.random.normal(k1, (v_h, v_in), jnp.float32) / math.sqrt(v_in)
    wu = jax.random.normal(k2, (v_h, v_h), jnp.float32) / math.sqrt(v_h)
    ws = jax.random.normal(k3, (s_h, s_in + v_h), jnp.float32) / math.sqrt(s_in + v_h)
    bs = jax.random.normal(k4, (s_h,), jnp.float32) * 0.01
    return (gamma, beta, wh, wu, ws, bs)


def gvp_feed_forward_block(scalar_feats, coord_feats, params, norm_scale=0.1):
    """Wrapper: channel-leading / lane-dense layout, row-tiled grid, reshapes back."""
    gamma, beta, wh, wu, ws, bs = params
    squeeze = scalar_feats.ndim == 4
    if squeeze:
        assert scalar_feats.shape[-1] == 1
        scalar_feats = scalar_feats[..., 0]
    assert coord_feats.ndim == 4 and coord_feats.shape[-1] == 3

    b, n, s_in = scalar_feats.shape
    v_in = coord_feats.shape[-2]
    v_h = wh.shape[0]
    s_h = ws.shape[0]
    N = b * n

    # Row tile: last (lane) dim of every block is a multiple of 128 -> unmasked stores.
    N_pad = max(_round_up(N, 128), 128)
    if N_pad <= TILE_N_MAX:
        tile_n = N_pad
    else:
        tile_n = TILE_N_MAX
        N_pad = _round_up(N, tile_n)
    grid = (N_pad // tile_n,)

    # TODO(synk): upstream should produce/consume the channel-leading layout directly;
    # each transpose below costs roughly one extra HBM read+write of the tensor.
    s_flat = scalar_feats.reshape(N, s_in).astype(jnp.float32)
    c_flat = coord_feats.reshape(N, v_in, 3).astype(jnp.float32)
    if N_pad != N:
        s_flat = jnp.pad(s_flat, ((0, N_pad - N), (0, 0)))
        c_flat = jnp.pad(c_flat, ((0, N_pad - N), (0, 0), (0, 0)))
    s2 = s_flat.T                                    # (s_in, N_pad)
    c2 = jnp.transpose(c_flat, (2, 1, 0))            # (3, v_in, N_pad)

    # Host-side weight prep: fused [Wh ; Wu@Wh] and pre-split Ws.
    w_uh = jnp.dot(wu, wh, precision=jax.lax.Precision.HIGHEST)          # (v_h, v_in)
    w_comb = jnp.concatenate([wh, w_uh], axis=0).astype(jnp.float32)     # (2*v_h, v_in)
    ws_s = ws[:, :s_in].astype(jnp.float32)                              # (s_h, s_in)
    ws_v = ws[:, s_in:].astype(jnp.float32)                              # (s_h, v_h)

    kernel = partial(_gvp_ff_kernel, float(norm_scale), math.sqrt(v_in))
    const = lambda i: (0, 0)

    s_out, c_out = pl.pallas_call(
        kernel,
        out_shape=(jax.ShapeDtypeStruct((s_h, N_pad), jnp.float32),
                   jax.ShapeDtypeStruct((3, v_h, N_pad), jnp.float32)),
        grid=grid,
        in_specs=[
            pl.BlockSpec((s_in, tile_n), lambda i: (0, i)),       # scalars (row-tiled)
            pl.BlockSpec((3, v_in, tile_n), lambda i: (0, 0, i)),  # coords  (row-tiled)
            pl.BlockSpec((s_in, 1), const),                        # gamma   (resident)
            pl.BlockSpec((s_in, 1), const),                        # beta    (resident)
            pl.BlockSpec((2 * v_h, v_in), const),                  # W_comb  (resident)
            pl.BlockSpec((s_h, s_in), const),                      # Ws_s    (resident)
            pl.BlockSpec((s_h, v_h), const),                       # Ws_v    (resident)
            pl.BlockSpec((s_h, 1), const),                         # bias    (resident)
        ],
        out_specs=(pl.BlockSpec((s_h, tile_n), lambda i: (0, i)),
                   pl.BlockSpec((3, v_h, tile_n), lambda i: (0, 0, i))),
        compiler_params=pltpu.CompilerParams(
            dimension_semantics=("parallel",),
            vmem_limit_bytes=32 * 1024 * 1024),
    )(s2, c2,
      gamma[:, None].astype(jnp.float32), beta[:, None].astype(jnp.float32),
      w_comb, ws_s, ws_v, bs[:, None].astype(jnp.float32))

    s_out = s_out[:, :N].T.reshape(b, n, s_h)
    if squeeze:
        s_out = s_out[..., None]
    c_out = jnp.transpose(c_out[:, :, :N], (2, 1, 0)).reshape(b, n, v_h, 3)
    return s_out, c_out


def gvp_feed_forward_reference(scalar_feats, coord_feats, params, norm_scale=0.1):
    """Plain-JAX mirror of the PyTorch forward, for verification (f32-exact matmuls)."""
    gamma, beta, wh, wu, ws, bs = params
    squeeze = scalar_feats.ndim == 4
    s = scalar_feats[..., 0] if squeeze else scalar_feats
    v_in = coord_feats.shape[-2]
    hp = jax.lax.Precision.HIGHEST

    mean = jnp.mean(s, axis=-1, keepdims=True)
    var = jnp.mean((s - mean) ** 2, axis=-1, keepdims=True)
    s_ln = (s - mean) / jnp.sqrt(var + EPS_LN) * gamma + beta

    ch_norm = jnp.sqrt(jnp.sum(coord_feats ** 2, -1, keepdims=True) + EPS_SAFE)
    crds = math.sqrt(v_in) * coord_feats / jnp.sum(ch_norm, -2, keepdims=True)

    vh = jnp.einsum('bncd,hc->bnhd', crds, wh, precision=hp)
    vh_norm = norm_scale * jnp.sqrt(jnp.sum(vh ** 2, -1) + EPS_SAFE)
    scalar_out = jnp.dot(jnp.concatenate([s_ln, vh_norm], -1), ws.T, precision=hp) + bs
    vu = jnp.einsum('bnhd,oh->bnod', vh, wu, precision=hp)
    phase = jnp.sqrt(jnp.sum(vu ** 2, -1, keepdims=True) + EPS_SAFE)

    s_out = jax.nn.relu(scalar_out)
    if squeeze:
        s_out = s_out[..., None]
    return s_out, jax.nn.relu(phase) * vu


if __name__ == "__main__":
    key = jax.random.PRNGKey(0)
    k_s, k_c, k_p = jax.random.split(key, 3)

    # dims: dim_in=(16, 4), dim_out=(32, 8) -> hidden=(32, 8); batch=2, seq=8
    dim_in, dim_out = (16, 4), (32, 8)
    b, n = 2, 8
    scalar_feats = jax.random.normal(k_s, (b, n, dim_in[0], 1), jnp.float32)  # 4D -> squeeze path
    coord_feats = jax.random.normal(k_c, (b, n, dim_in[1], 3), jnp.float32)

    params = init_params(k_p, dim_in, dim_out)

    fwd = jax.jit(partial(gvp_feed_forward_block, params=params, norm_scale=0.1))
    s_out, c_out = fwd(scalar_feats, coord_feats)
    jax.block_until_ready((s_out, c_out))

    s_exp, c_exp = gvp_feed_forward_reference(scalar_feats, coord_feats, params, norm_scale=0.1)
    assert s_out.shape == (b, n, max(dim_in[0], dim_out[0]), 1)
    assert c_out.shape == (b, n, max(dim_in[1], dim_out[1]), 3)
    # Tolerance covers MXU pass-precision and the host-fused (Wu @ Wh) reassociation
    # relative to the reference's sequential Wh -> Wu projections.
    assert jnp.allclose(s_out, s_exp, rtol=1e-2, atol=1e-2)
    assert jnp.allclose(c_out, c_exp, rtol=1e-2, atol=1e-2)

    print("KERNEL_OK")
</pallas_src>

<mosaic_0001>
module attributes {stable_mosaic.version = 11 : i64} {
  func.func @_gvp_ff_kernel(%arg0: i32, %arg1: memref<16x128xf32, #tpu.memory_space<vmem>>, %arg2: memref<3x4x128xf32, #tpu.memory_space<vmem>>, %arg3: memref<16x1xf32, #tpu.memory_space<vmem>>, %arg4: memref<16x1xf32, #tpu.memory_space<vmem>>, %arg5: memref<16x4xf32, #tpu.memory_space<vmem>>, %arg6: memref<32x16xf32, #tpu.memory_space<vmem>>, %arg7: memref<32x8xf32, #tpu.memory_space<vmem>>, %arg8: memref<32x1xf32, #tpu.memory_space<vmem>>, %arg9: memref<32x128xf32, #tpu.memory_space<vmem>>, %arg10: memref<3x8x128xf32, #tpu.memory_space<vmem>>) attributes {dimension_semantics = [#tpu.dimension_semantics<parallel>], iteration_bounds = array<i64: 1>, scalar_prefetch = 0 : i64, scratch_operands = 0 : i64, tpu.core_type = #tpu.core_type<tc>, window_params = [{transform_indices = @transform_0, window_bounds = array<i64: 16, 128>}, {transform_indices = @transform_1, window_bounds = array<i64: 3, 4, 128>}, {pipeline_mode = #tpu.pipeline_mode<synchronous>, transform_indices = @transform_2, window_bounds = array<i64: 16, 1>}, {pipeline_mode = #tpu.pipeline_mode<synchronous>, transform_indices = @transform_3, window_bounds = array<i64: 16, 1>}, {pipeline_mode = #tpu.pipeline_mode<synchronous>, transform_indices = @transform_4, window_bounds = array<i64: 16, 4>}, {pipeline_mode = #tpu.pipeline_mode<synchronous>, transform_indices = @transform_5, window_bounds = array<i64: 32, 16>}, {pipeline_mode = #tpu.pipeline_mode<synchronous>, transform_indices = @transform_6, window_bounds = array<i64: 32, 8>}, {pipeline_mode = #tpu.pipeline_mode<synchronous>, transform_indices = @transform_7, window_bounds = array<i64: 32, 1>}, {transform_indices = @transform_8, window_bounds = array<i64: 32, 128>}, {transform_indices = @transform_9, window_bounds = array<i64: 3, 8, 128>}]} {
    %c0 = arith.constant 0 : index
    %c0_0 = arith.constant 0 : index
    %0 = vector.load %arg1[%c0, %c0_0] : memref<16x128xf32, #tpu.memory_space<vmem>>, vector<16x128xf32>
    %cst = arith.constant dense<0.000000e+00> : vector<128xf32>
    %1 = vector.multi_reduction <add>, %0, %cst [0] : vector<16x128xf32> to vector<128xf32>
    %2 = vector.shape_cast %1 : vector<128xf32> to vector<1x128xf32>
    %cst_1 = arith.constant 1.600000e+01 : f32
    %3 = vector.broadcast %cst_1 : f32 to vector<1x128xf32>
    %4 = arith.divf %2, %3 : vector<1x128xf32>
    %5 = vector.broadcast %4 : vector<1x128xf32> to vector<16x128xf32>
    %6 = arith.subf %0, %5 : vector<16x128xf32>
    %7 = arith.mulf %6, %6 : vector<16x128xf32>
    %cst_2 = arith.constant dense<0.000000e+00> : vector<128xf32>
    %8 = vector.multi_reduction <add>, %7, %cst_2 [0] : vector<16x128xf32> to vector<128xf32>
    %9 = vector.shape_cast %8 : vector<128xf32> to vector<1x128xf32>
    %cst_3 = arith.constant 1.600000e+01 : f32
    %10 = vector.broadcast %cst_3 : f32 to vector<1x128xf32>
    %11 = arith.divf %9, %10 : vector<1x128xf32>
    %cst_4 = arith.constant 9.99999974E-6 : f32
    %12 = vector.broadcast %cst_4 : f32 to vector<1x128xf32>
    %13 = arith.addf %11, %12 : vector<1x128xf32>
    %14 = math.rsqrt %13 : vector<1x128xf32>
    %15 = vector.broadcast %14 : vector<1x128xf32> to vector<16x128xf32>
    %16 = arith.mulf %6, %15 : vector<16x128xf32>
    %c0_5 = arith.constant 0 : index
    %c0_6 = arith.constant 0 : index
    %17 = vector.load %arg3[%c0_5, %c0_6] : memref<16x1xf32, #tpu.memory_space<vmem>>, vector<16x1xf32>
    %18 = vector.broadcast %17 : vector<16x1xf32> to vector<16x128xf32>
    %19 = arith.mulf %16, %18 : vector<16x128xf32>
    %c0_7 = arith.constant 0 : index
    %c0_8 = arith.constant 0 : index
    %20 = vector.load %arg4[%c0_7, %c0_8] : memref<16x1xf32, #tpu.memory_space<vmem>>, vector<16x1xf32>
    %21 = vector.broadcast %20 : vector<16x1xf32> to vector<16x128xf32>
    %22 = arith.addf %19, %21 : vector<16x128xf32>
    %c0_9 = arith.constant 0 : index
    %c0_10 = arith.constant 0 : index
    %c0_11 = arith.constant 0 : index
    %23 = vector.load %arg2[%c0_9, %c0_10, %c0_11] : memref<3x4x128xf32, #tpu.memory_space<vmem>>, vector<1x4x128xf32>
    %24 = vector.shape_cast %23 : vector<1x4x128xf32> to vector<4x128xf32>
    %c1 = arith.constant 1 : index
    %c0_12 = arith.constant 0 : index
    %c0_13 = arith.constant 0 : index
    %25 = vector.load %arg2[%c1, %c0_12, %c0_13] : memref<3x4x128xf32, #tpu.memory_space<vmem>>, vector<1x4x128xf32>
    %26 = vector.shape_cast %25 : vector<1x4x128xf32> to vector<4x128xf32>
    %c2 = arith.constant 2 : index
    %c0_14 = arith.constant 0 : index
    %c0_15 = arith.constant 0 : index
    %27 = vector.load %arg2[%c2, %c0_14, %c0_15] : memref<3x4x128xf32, #tpu.memory_space<vmem>>, vector<1x4x128xf32>
    %28 = vector.shape_cast %27 : vector<1x4x128xf32> to vector<4x128xf32>
    %29 = arith.mulf %24, %24 : vector<4x128xf32>
    %30 = arith.mulf %26, %26 : vector<4x128xf32>
    %31 = arith.addf %29, %30 : vector<4x128xf32>
    %32 = arith.mulf %28, %28 : vector<4x128xf32>
    %33 = arith.addf %31, %32 : vector<4x128xf32>
    %cst_16 = arith.constant 9.99999996E-13 : f32
    %34 = vector.broadcast %cst_16 : f32 to vector<4x128xf32>
    %35 = arith.addf %33, %34 : vector<4x128xf32>
    %36 = math.sqrt %35 : vector<4x128xf32>
    %cst_17 = arith.constant dense<0.000000e+00> : vector<128xf32>
    %37 = vector.multi_reduction <add>, %36, %cst_17 [0] : vector<4x128xf32> to vector<128xf32>
    %38 = vector.shape_cast %37 : vector<128xf32> to vector<1x128xf32>
    %39 = tpu.reciprocal %38 : vector<1x128xf32> -> vector<1x128xf32>
    %cst_18 = arith.constant 2.000000e+00 : f32
    %40 = vector.broadcast %cst_18 : f32 to vector<1x128xf32>
    %41 = arith.mulf %40, %39 : vector<1x128xf32>
    %c0_19 = arith.constant 0 : index
    %c0_20 = arith.constant 0 : index
    %42 = vector.load %arg5[%c0_19, %c0_20] : memref<16x4xf32, #tpu.memory_space<vmem>>, vector<16x4xf32>
    %cst_21 = arith.constant dense<0.000000e+00> : vector<16x128xf32>
    %43 = tpu.matmul %42, %24, %cst_21 {dimension_numbers = #tpu.dot_dimension_numbers<[1], [0], [0], [1], [0, 0, 1, 1], [], []>} : vector<16x4xf32>, vector<4x128xf32>, vector<16x128xf32> -> vector<16x128xf32>
    %44 = vector.broadcast %41 : vector<1x128xf32> to vector<16x128xf32>
    %45 = arith.mulf %43, %44 : vector<16x128xf32>
    %cst_22 = arith.constant dense<0.000000e+00> : vector<16x128xf32>
    %46 = tpu.matmul %42, %26, %cst_22 {dimension_numbers = #tpu.dot_dimension_numbers<[1], [0], [0], [1], [0, 0, 1, 1], [], []>} : vector<16x4xf32>, vector<4x128xf32>, vector<16x128xf32> -> vector<16x128xf32>
    %47 = vector.broadcast %41 : vector<1x128xf32> to vector<16x128xf32>
    %48 = arith.mulf %46, %47 : vector<16x128xf32>
    %cst_23 = arith.constant dense<0.000000e+00> : vector<16x128xf32>
    %49 = tpu.matmul %42, %28, %cst_23 {dimension_numbers = #tpu.dot_dimension_numbers<[1], [0], [0], [1], [0, 0, 1, 1], [], []>} : vector<16x4xf32>, vector<4x128xf32>, vector<16x128xf32> -> vector<16x128xf32>
    %50 = vector.broadcast %41 : vector<1x128xf32> to vector<16x128xf32>
    %51 = arith.mulf %49, %50 : vector<16x128xf32>
    %52 = vector.extract_strided_slice %45 {offsets = [0, 0], sizes = [8, 128], strides = [1, 1]} : vector<16x128xf32> to vector<8x128xf32>
    %53 = vector.extract_strided_slice %45 {offsets = [8, 0], sizes = [8, 128], strides = [1, 1]} : vector<16x128xf32> to vector<8x128xf32>
    %54 = vector.extract_strided_slice %48 {offsets = [0, 0], sizes = [8, 128], strides = [1, 1]} : vector<16x128xf32> to vector<8x128xf32>
    %55 = vector.extract_strided_slice %48 {offsets = [8, 0], sizes = [8, 128], strides = [1, 1]} : vector<16x128xf32> to vector<8x128xf32>
    %56 = vector.extract_strided_slice %51 {offsets = [0, 0], sizes = [8, 128], strides = [1, 1]} : vector<16x128xf32> to vector<8x128xf32>
    %57 = vector.extract_strided_slice %51 {offsets = [8, 0], sizes = [8, 128], strides = [1, 1]} : vector<16x128xf32> to vector<8x128xf32>
    %58 = arith.mulf %52, %52 : vector<8x128xf32>
    %59 = arith.mulf %54, %54 : vector<8x128xf32>
    %60 = arith.addf %58, %59 : vector<8x128xf32>
    %61 = arith.mulf %56, %56 : vector<8x128xf32>
    %62 = arith.addf %60, %61 : vector<8x128xf32>
    %cst_24 = arith.constant 9.99999996E-13 : f32
    %63 = vector.broadcast %cst_24 : f32 to vector<8x128xf32>
    %64 = arith.addf %62, %63 : vector<8x128xf32>
    %65 = math.sqrt %64 : vector<8x128xf32>
    %cst_25 = arith.constant 1.000000e-01 : f32
    %66 = vector.broadcast %cst_25 : f32 to vector<8x128xf32>
    %67 = arith.mulf %66, %65 : vector<8x128xf32>
    %c0_26 = arith.constant 0 : index
    %c0_27 = arith.constant 0 : index
    %68 = vector.load %arg6[%c0_26, %c0_27] : memref<32x16xf32, #tpu.memory_space<vmem>>, vector<32x16xf32>
    %cst_28 = arith.constant dense<0.000000e+00> : vector<32x128xf32>
    %69 = tpu.matmul %68, %22, %cst_28 {dimension_numbers = #tpu.dot_dimension_numbers<[1], [0], [0], [1], [0, 0, 1, 1], [], []>} : vector<32x16xf32>, vector<16x128xf32>, vector<32x128xf32> -> vector<32x128xf32>
    %c0_29 = arith.constant 0 : index
    %c0_30 = arith.constant 0 : index
    %70 = vector.load %arg7[%c0_29, %c0_30] : memref<32x8xf32, #tpu.memory_space<vmem>>, vector<32x8xf32>
    %cst_31 = arith.constant dense<0.000000e+00> : vector<32x128xf32>
    %71 = tpu.matmul %70, %67, %cst_31 {dimension_numbers = #tpu.dot_dimension_numbers<[1], [0], [0], [1], [0, 0, 1, 1], [], []>} : vector<32x8xf32>, vector<8x128xf32>, vector<32x128xf32> -> vector<32x128xf32>
    %72 = arith.addf %69, %71 : vector<32x128xf32>
    %c0_32 = arith.constant 0 : index
    %c0_33 = arith.constant 0 : index
    %73 = vector.load %arg8[%c0_32, %c0_33] : memref<32x1xf32, #tpu.memory_space<vmem>>, vector<32x1xf32>
    %74 = vector.broadcast %73 : vector<32x1xf32> to vector<32x128xf32>
    %75 = arith.addf %72, %74 : vector<32x128xf32>
    %cst_34 = arith.constant 0.000000e+00 : f32
    %76 = vector.broadcast %cst_34 : f32 to vector<32x128xf32>
    %77 = arith.maximumf %75, %76 : vector<32x128xf32>
    %c0_35 = arith.constant 0 : index
    %c0_36 = arith.constant 0 : index
    %78 = vector.load %arg9[%c0_35, %c0_36] : memref<32x128xf32, #tpu.memory_space<vmem>>, vector<32x128xf32>
    tpu.vector_store %arg9[%c0_35, %c0_36], %77 {strides = array<i32>} : memref<32x128xf32, #tpu.memory_space<vmem>>, vector<32x128xf32>,
    %79 = arith.mulf %53, %53 : vector<8x128xf32>
    %80 = arith.mulf %55, %55 : vector<8x128xf32>
    %81 = arith.addf %79, %80 : vector<8x128xf32>
    %82 = arith.mulf %57, %57 : vector<8x128xf32>
    %83 = arith.addf %81, %82 : vector<8x128xf32>
    %cst_37 = arith.constant 9.99999996E-13 : f32
    %84 = vector.broadcast %cst_37 : f32 to vector<8x128xf32>
    %85 = arith.addf %83, %84 : vector<8x128xf32>
    %86 = math.sqrt %85 : vector<8x128xf32>
    %87 = arith.mulf %86, %53 : vector<8x128xf32>
    %c0_38 = arith.constant 0 : index
    %c0_39 = arith.constant 0 : index
    %c0_40 = arith.constant 0 : index
    %88 = vector.load %arg10[%c0_38, %c0_39, %c0_40] : memref<3x8x128xf32, #tpu.memory_space<vmem>>, vector<1x8x128xf32>
    %89 = vector.shape_cast %88 : vector<1x8x128xf32> to vector<8x128xf32>
    %90 = vector.shape_cast %87 : vector<8x128xf32> to vector<1x8x128xf32>
    tpu.vector_store %arg10[%c0_38, %c0_39, %c0_40], %90 {strides = array<i32>} : memref<3x8x128xf32, #tpu.memory_space<vmem>>, vector<1x8x128xf32>,
    %91 = arith.mulf %86, %55 : vector<8x128xf32>
    %c1_41 = arith.constant 1 : index
    %c0_42 = arith.constant 0 : index
    %c0_43 = arith.constant 0 : index
    %92 = vector.load %arg10[%c1_41, %c0_42, %c0_43] : memref<3x8x128xf32, #tpu.memory_space<vmem>>, vector<1x8x128xf32>
    %93 = vector.shape_cast %92 : vector<1x8x128xf32> to vector<8x128xf32>
    %94 = vector.shape_cast %91 : vector<8x128xf32> to vector<1x8x128xf32>
    tpu.vector_store %arg10[%c1_41, %c0_42, %c0_43], %94 {strides = array<i32>} : memref<3x8x128xf32, #tpu.memory_space<vmem>>, vector<1x8x128xf32>,
    %95 = arith.mulf %86, %57 : vector<8x128xf32>
    %c2_44 = arith.constant 2 : index
    %c0_45 = arith.constant 0 : index
    %c0_46 = arith.constant 0 : index
    %96 = vector.load %arg10[%c2_44, %c0_45, %c0_46] : memref<3x8x128xf32, #tpu.memory_space<vmem>>, vector<1x8x128xf32>
    %97 = vector.shape_cast %96 : vector<1x8x128xf32> to vector<8x128xf32>
    %98 = vector.shape_cast %95 : vector<8x128xf32> to vector<1x8x128xf32>
    tpu.vector_store %arg10[%c2_44, %c0_45, %c0_46], %98 {strides = array<i32>} : memref<3x8x128xf32, #tpu.memory_space<vmem>>, vector<1x8x128xf32>,
    return
  }
  func.func @transform_0(%arg0: i32) -> (i32, i32) {
    %c0_i32 = arith.constant 0 : i32
    %c0_i32_0 = arith.constant 0 : i32
    return %c0_i32, %arg0 : i32, i32
  }
  func.func @transform_1(%arg0: i32) -> (i32, i32, i32) {
    %c0_i32 = arith.constant 0 : i32
    %c0_i32_0 = arith.constant 0 : i32
    %c0_i32_1 = arith.constant 0 : i32
    return %c0_i32, %c0_i32_0, %arg0 : i32, i32, i32
  }
  func.func @transform_2(%arg0: i32) -> (i32, i32) {
    %c0_i32 = arith.constant 0 : i32
    %c0_i32_0 = arith.constant 0 : i32
    %c0_i32_1 = arith.constant 0 : i32
    return %c0_i32, %c0_i32_0 : i32, i32
  }
  func.func @transform_3(%arg0: i32) -> (i32, i32) {
    %c0_i32 = arith.constant 0 : i32
    %c0_i32_0 = arith.constant 0 : i32
    %c0_i32_1 = arith.constant 0 : i32
    return %c0_i32, %c0_i32_0 : i32, i32
  }
  func.func @transform_4(%arg0: i32) -> (i32, i32) {
    %c0_i32 = arith.constant 0 : i32
    %c0_i32_0 = arith.constant 0 : i32
    %c0_i32_1 = arith.constant 0 : i32
    return %c0_i32, %c0_i32_0 : i32, i32
  }
  func.func @transform_5(%arg0: i32) -> (i32, i32) {
    %c0_i32 = arith.constant 0 : i32
    %c0_i32_0 = arith.constant 0 : i32
    %c0_i32_1 = arith.constant 0 : i32
    return %c0_i32, %c0_i32_0 : i32, i32
  }
  func.func @transform_6(%arg0: i32) -> (i32, i32) {
    %c0_i32 = arith.constant 0 : i32
    %c0_i32_0 = arith.constant 0 : i32
    %c0_i32_1 = arith.constant 0 : i32
    return %c0_i32, %c0_i32_0 : i32, i32
  }
  func.func @transform_7(%arg0: i32) -> (i32, i32) {
    %c0_i32 = arith.constant 0 : i32
    %c0_i32_0 = arith.constant 0 : i32
    %c0_i32_1 = arith.constant 0 : i32
    return %c0_i32, %c0_i32_0 : i32, i32
  }
  func.func @transform_8(%arg0: i32) -> (i32, i32) {
    %c0_i32 = arith.constant 0 : i32
    %c0_i32_0 = arith.constant 0 : i32
    return %c0_i32, %arg0 : i32, i32
  }
  func.func @transform_9(%arg0: i32) -> (i32, i32, i32) {
    %c0_i32 = arith.constant 0 : i32
    %c0_i32_0 = arith.constant 0 : i32
    %c0_i32_1 = arith.constant 0 : i32
    return %c0_i32, %c0_i32_0, %arg0 : i32, i32, i32
  }
}

</mosaic_0001>

<llo_original>
// kernel: gvp_feed_forward_block.1
$region0: #{gvp_feed_forward_block.1}
  #allocation0 [shape = 'u32[]', space=smem, size = 0x4, offset = 0x4, fixed_abs, tag = 'smem constant byte address 0x4 - core index']
  #allocation1 [shape = 'u32[144,128]{1,0:T(1,128)}', space=vmem, size = 0x12000, scoped, tag = 'internal scratch']
  %s0 = inlined_call_operand.vmem [shape: f32[16,128], index: 0, kind: input, shape index: {}]
  %s1 = inlined_call_operand.vmem [shape: f32[3,4,128], index: 1, kind: input, shape index: {}]
  %s2 = inlined_call_operand.vmem [shape: f32[16,1], index: 2, kind: input, shape index: {}]
  %s3 = inlined_call_operand.vmem [shape: f32[16,1], index: 3, kind: input, shape index: {}]
  %s4 = inlined_call_operand.vmem [shape: f32[16,4], index: 4, kind: input, shape index: {}]
  %s5 = inlined_call_operand.vmem [shape: f32[32,16], index: 5, kind: input, shape index: {}]
  %s6 = inlined_call_operand.vmem [shape: f32[32,8], index: 6, kind: input, shape index: {}]
  %s7 = inlined_call_operand.vmem [shape: f32[32,1], index: 7, kind: input, shape index: {}]
  %s8 = inlined_call_operand.vmem [shape: f32[32,128], index: 8, kind: output, shape index: {0}]
  %s9 = inlined_call_operand.vmem [shape: f32[3,8,128], index: 9, kind: output, shape index: {1}]
  %10 = xla_tuple %s8, %s9
  %s11 = sld [smem:[#allocation0]]
  $region50: #{gvp_feed_forward_block.1} parent=0
    _
  %s13 = ssub.s32 1, %s11
  %s14 = scalar_select 0, %s13, %s11
  // Predicated region
  $region2: #{gvp_feed_forward_block.1} parent=0 // pred_check
    _
  $region3: #{gvp_feed_forward_block.1} parent=0 // pred_check_branch
    %16 = sbr.rel (0) target = $region5
  $region4: #{gvp_feed_forward_block.1} parent=0 // pred_region
    _
  $region5: #{gvp_feed_forward_block.1} parent=0 // pred_fallthru
    _
  // Predicated region
  $region6: #{gvp_feed_forward_block.1} parent=0 // pred_check
    _
  $region7: #{gvp_feed_forward_block.1} parent=0 // pred_check_branch
    %18 = sbr.rel (0) target = $region9
  $region8: #{gvp_feed_forward_block.1} parent=0 // pred_region
    _
  $region9: #{gvp_feed_forward_block.1} parent=0 // pred_fallthru
    _
  // Predicated region
  $region10: #{gvp_feed_forward_block.1} parent=0 // pred_check
    _
  $region11: #{gvp_feed_forward_block.1} parent=0 // pred_check_branch
    %20 = sbr.rel (0) target = $region13
  $region12: #{gvp_feed_forward_block.1} parent=0 // pred_region
    _
  $region13: #{gvp_feed_forward_block.1} parent=0 // pred_fallthru
    _
  // Predicated region
  $region14: #{gvp_feed_forward_block.1} parent=0 // pred_check
    _
  $region15: #{gvp_feed_forward_block.1} parent=0 // pred_check_branch
    %22 = sbr.rel (0) target = $region17
  $region16: #{gvp_feed_forward_block.1} parent=0 // pred_region
    _
  $region17: #{gvp_feed_forward_block.1} parent=0 // pred_fallthru
    _
  // Predicated region
  $region18: #{gvp_feed_forward_block.1} parent=0 // pred_check
    _
  $region19: #{gvp_feed_forward_block.1} parent=0 // pred_check_branch
    %24 = sbr.rel (0) target = $region21
  $region20: #{gvp_feed_forward_block.1} parent=0 // pred_region
    _
  $region21: #{gvp_feed_forward_block.1} parent=0 // pred_fallthru
    _
  // Predicated region
  $region22: #{gvp_feed_forward_block.1} parent=0 // pred_check
    _
  $region23: #{gvp_feed_forward_block.1} parent=0 // pred_check_branch
    %26 = sbr.rel (0) target = $region25
  $region24: #{gvp_feed_forward_block.1} parent=0 // pred_region
    _
  $region25: #{gvp_feed_forward_block.1} parent=0 // pred_fallthru
    _
  // Predicated region
  $region26: #{gvp_feed_forward_block.1} parent=0 // pred_check
    _
  $region27: #{gvp_feed_forward_block.1} parent=0 // pred_check_branch
    %28 = sbr.rel (0) target = $region29
  $region28: #{gvp_feed_forward_block.1} parent=0 // pred_region
    _
  $region29: #{gvp_feed_forward_block.1} parent=0 // pred_fallthru
    _
  // Predicated region
  $region30: #{gvp_feed_forward_block.1} parent=0 // pred_check
    _
  $region31: #{gvp_feed_forward_block.1} parent=0 // pred_check_branch
    %30 = sbr.rel (0) target = $region33
  $region32: #{gvp_feed_forward_block.1} parent=0 // pred_region
    _
  $region33: #{gvp_feed_forward_block.1} parent=0 // pred_fallthru
    _
  %v31 = vld [vmem:[%s0] sm:$0xff]
  %v32 = vld [vmem:[%s0 + $0x8] sm:$0xff]
  %v33 = vadd.f32 %v31, %v32
  %v34 = vrot.slane %v33, 4
  %v35 = vadd.f32 %v33, %v34
  %v36 = vrot.slane %v35, 2
  %v37 = vadd.f32 %v35, %v36
  %v38 = vrot.slane %v37, 1
  %v39 = vadd.f32 %v37, %v38
  %v40 = vrcp.pop 16.0
  %v41 = vmul.f32 %v39, %v40
  %v42 = vsub.f32 %v31, %v41
  %v43 = vsub.f32 %v32, %v41
  %v44 = vmul.f32 %v42, %v42
  %v45 = vmul.f32 %v43, %v43
  %v46 = vadd.f32 %v44, %v45
  %v47 = vrot.slane %v46, 4
  %v48 = vadd.f32 %v46, %v47
  %v49 = vrot.slane %v48, 2
  %v50 = vadd.f32 %v48, %v49
  %v51 = vrot.slane %v50, 1
  %v52 = vadd.f32 %v50, %v51
  %v53 = vmul.f32 %v52, %v40
  %v54 = vadd.f32 %v53, 1e-05
  %v55 = vrsqrt.pop %v54
  %v56 = vmul.f32 %v42, %v55
  %v57 = vmul.f32 %v43, %v55
  %v58 = vld [vmem:[%s2] sm:$0xff]
  %v59 = vld [vmem:[%s2 + $0x8] sm:$0xff]
  %61 = vset.pattern.permute.xlu0 0
  %62 = vperm.xlu0 %61, %v58
  %v63 = vpop.permute.xlu0 %62
  %66 = vset.pattern.permute.xlu0 0
  %67 = vperm.xlu0 %66, %v59
  %v68 = vpop.permute.xlu0 %67
  %v70 = vmul.f32 %v56, %v63
  %v71 = vmul.f32 %v57, %v68
  %v72 = vld [vmem:[%s3] sm:$0xff]
  %v73 = vld [vmem:[%s3 + $0x8] sm:$0xff]
  %75 = vset.pattern.permute.xlu0 0
  %76 = vperm.xlu0 %75, %v72
  %v77 = vpop.permute.xlu0 %76
  %80 = vset.pattern.permute.xlu0 0
  %81 = vperm.xlu0 %80, %v73
  %v82 = vpop.permute.xlu0 %81
  %v84 = vadd.f32 %v70, %v77
  %v85 = vadd.f32 %v71, %v82
  %v86 = vld [vmem:[%s1] sm:$0xf]
  %s87 = scalar_lea.vmem %s1, 4
  %v88 = vld [vmem:[%s87] sm:$0xf]
  %s89 = scalar_lea.vmem %s1, 8
  %v90 = vld [vmem:[%s89] sm:$0xf]
  %v91 = vmul.f32 %v86, %v86
  %v92 = vmul.f32 %v88, %v88
  %v93 = vadd.f32 %v91, %v92
  %v94 = vmul.f32 %v90, %v90
  %v95 = vadd.f32 %v93, %v94
  %v96 = vadd.f32 %v95, 1e-12
  %v97 = vrsqrt.pop %v96
  %v98 = vmul.f32 %v96, %v97
  %vm99 = vcmp.eq.f32.partialorder %v96, inf
  %v100 = vsel %vm99, %v96, %v98
  %vm101 = vcmp.eq.f32.partialorder %v96, 0.0
  %v102 = vand.u32 %v96, 2147483648
  %v103 = vsel %vm101, %v102, %v100
  %vm104 = vcmask 1043456
  %v105 = vsel %vm104, %v103, 0.0
  %v106 = vrot.slane %v105, 4
  %v107 = vadd.f32 %v105, %v106
  %v108 = vrot.slane %v107, 2
  %v109 = vadd.f32 %v107, %v108
  %v110 = vrot.slane %v109, 1
  %v111 = vadd.f32 %v109, %v110
  %v112 = vrcp.pop %v111
  %v113 = vmul.f32 %v112, 2.0
  %v114 = vld [vmem:[%s4] sm:$0xff]
  %v115 = vld [vmem:[%s4 + $0x8] sm:$0xff]
  %vm116 = vcmask 31744
  %v118 = vsel %vm116, %v114, 0
  %v121 = vsel %vm116, %v115, 0
  %v124 = vsel %vm104, %v86, 0
  %126 = vmatprep.subr.mxu0 0.0
  %127 = vmatpush1.msra.mxu0 %v124
  %128 = vmatprep.subr.mxu0 0.0
  %129 = vmatpush1.msra.mxu0 0.0
  %130 = vmatprep.subr.mxu0 0.0
  %131 = vmatpush1.msra.mxu0 0.0
  %132 = vmatprep.subr.mxu0 0.0
  %133 = vmatpush1.msra.mxu0 0.0
  %134 = vmatprep.subr.mxu0 0.0
  %135 = vmatpush1.msra.mxu0 0.0
  %136 = vmatprep.subr.mxu0 0.0
  %137 = vmatpush1.msra.mxu0 0.0
  %138 = vmatprep.subr.mxu0 0.0
  %139 = vmatpush1.msra.mxu0 0.0
  %140 = vmatprep.subr.mxu0 0.0
  %141 = vmatpush1.msra.mxu0 0.0
  %142 = vmatprep.subr.mxu0 0.0
  %143 = vmatpush1.msra.mxu0 0.0
  %144 = vmatprep.subr.mxu0 0.0
  %145 = vmatpush1.msra.mxu0 0.0
  %146 = vmatprep.subr.mxu0 0.0
  %147 = vmatpush1.msra.mxu0 0.0
  %148 = vmatprep.subr.mxu0 0.0
  %149 = vmatpush1.msra.mxu0 0.0
  %150 = vmatprep.subr.mxu0 0.0
  %151 = vmatpush1.msra.mxu0 0.0
  %152 = vmatprep.subr.mxu0 0.0
  %153 = vmatpush1.msra.mxu0 0.0
  %154 = vmatprep.subr.mxu0 0.0
  %155 = vmatpush1.msra.mxu0 0.0
  %156 = vmatprep.subr.mxu0 0.0
  %157 = vmatpush1.msra.mxu0 0.0
  %158 = vmatprep.subr.mxu0 0.0
  %159 = vmatpush1.msra.mxu0 0.0
  %160 = vmatprep.subr.mxu0 0.0
  %161 = vmatpush1.msra.mxu0 0.0
  %162 = vmatprep.subr.mxu0 0.0
  %163 = vmatpush1.msra.mxu0 0.0
  %164 = vmatprep.subr.mxu0 0.0
  %165 = vmatpush1.msra.mxu0 0.0
  %166 = vmatprep.subr.mxu0 0.0
  %167 = vmatpush1.msra.mxu0 0.0
  %168 = vmatprep.subr.mxu0 0.0
  %169 = vmatpush1.msra.mxu0 0.0
  %170 = vmatprep.subr.mxu0 0.0
  %171 = vmatpush1.msra.mxu0 0.0
  %172 = vmatprep.subr.mxu0 0.0
  %173 = vmatpush1.msra.mxu0 0.0
  %174 = vmatprep.subr.mxu0 0.0
  %175 = vmatpush1.msra.mxu0 0.0
  %176 = vmatprep.subr.mxu0 0.0
  %177 = vmatpush1.msra.mxu0 0.0
  %178 = vmatprep.subr.mxu0 0.0
  %179 = vmatpush1.msra.mxu0 0.0
  %180 = vmatprep.subr.mxu0 0.0
  %181 = vmatpush1.msra.mxu0 0.0
  %182 = vmatprep.subr.mxu0 0.0
  %183 = vmatpush1.msra.mxu0 0.0
  %184 = vmatprep.subr.mxu0 0.0
  %185 = vmatpush1.msra.mxu0 0.0
  %186 = vmatprep.subr.mxu0 0.0
  %187 = vmatpush1.msra.mxu0 0.0
  %188 = vmatprep.subr.mxu0 0.0
  %189 = vmatpush1.msra.mxu0 0.0
  %190 = vmatprep.mubr.f32.mxu0 0.0
  %191 = vmatmul.mubr.f32.gmra.mrb[0].mxu0 %v118
  %v192 = vpop.f32.mrb[0].mxu0
  %v193 = vadd.f32 0.0, %v192
  %v194 = vpop.f32.mrb[0].mxu0
  %195 = vmatprep.mubr.f32.mxu0 0.0
  %196 = vmatmul.mubr.f32.gmra.mrb[0].mxu0 %v121
  %v197 = vpop.f32.mrb[0].mxu0
  %v198 = vadd.f32 0.0, %v197
  %v199 = vpop.f32.mrb[0].mxu0
  %200 = vdwg.mxu0
  %v201 = vmul.f32 %v193, %v113
  %v202 = vmul.f32 %v198, %v113
  %v204 = vsel %vm104, %v88, 0
  %206 = vmatprep.subr.mxu0 0.0
  %207 = vmatpush1.msra.mxu0 %v204
  %208 = vmatprep.subr.mxu0 0.0
  %209 = vmatpush1.msra.mxu0 0.0
  %210 = vmatprep.subr.mxu0 0.0
  %211 = vmatpush1.msra.mxu0 0.0
  %212 = vmatprep.subr.mxu0 0.0
  %213 = vmatpush1.msra.mxu0 0.0
  %214 = vmatprep.subr.mxu0 0.0
  %215 = vmatpush1.msra.mxu0 0.0
  %216 = vmatprep.subr.mxu0 0.0
  %217 = vmatpush1.msra.mxu0 0.0
  %218 = vmatprep.subr.mxu0 0.0
  %219 = vmatpush1.msra.mxu0 0.0
  %220 = vmatprep.subr.mxu0 0.0
  %221 = vmatpush1.msra.mxu0 0.0
  %222 = vmatprep.subr.mxu0 0.0
  %223 = vmatpush1.msra.mxu0 0.0
  %224 = vmatprep.subr.mxu0 0.0
  %225 = vmatpush1.msra.mxu0 0.0
  %226 = vmatprep.subr.mxu0 0.0
  %227 = vmatpush1.msra.mxu0 0.0
  %228 = vmatprep.subr.mxu0 0.0
  %229 = vmatpush1.msra.mxu0 0.0
  %230 = vmatprep.subr.mxu0 0.0
  %231 = vmatpush1.msra.mxu0 0.0
  %232 = vmatprep.subr.mxu0 0.0
  %233 = vmatpush1.msra.mxu0 0.0
  %234 = vmatprep.subr.mxu0 0.0
  %235 = vmatpush1.msra.mxu0 0.0
  %236 = vmatprep.subr.mxu0 0.0
  %237 = vmatpush1.msra.mxu0 0.0
  %238 = vmatprep.subr.mxu0 0.0
  %239 = vmatpush1.msra.mxu0 0.0
  %240 = vmatprep.subr.mxu0 0.0
  %241 = vmatpush1.msra.mxu0 0.0
  %242 = vmatprep.subr.mxu0 0.0
  %243 = vmatpush1.msra.mxu0 0.0
  %244 = vmatprep.subr.mxu0 0.0
  %245 = vmatpush1.msra.mxu0 0.0
  %246 = vmatprep.subr.mxu0 0.0
  %247 = vmatpush1.msra.mxu0 0.0
  %248 = vmatprep.subr.mxu0 0.0
  %249 = vmatpush1.msra.mxu0 0.0
  %250 = vmatprep.subr.mxu0 0.0
  %251 = vmatpush1.msra.mxu0 0.0
  %252 = vmatprep.subr.mxu0 0.0
  %253 = vmatpush1.msra.mxu0 0.0
  %254 = vmatprep.subr.mxu0 0.0
  %255 = vmatpush1.msra.mxu0 0.0
  %256 = vmatprep.subr.mxu0 0.0
  %257 = vmatpush1.msra.mxu0 0.0
  %258 = vmatprep.subr.mxu0 0.0
  %259 = vmatpush1.msra.mxu0 0.0
  %260 = vmatprep.subr.mxu0 0.0
  %261 = vmatpush1.msra.mxu0 0.0
  %262 = vmatprep.subr.mxu0 0.0
  %263 = vmatpush1.msra.mxu0 0.0
  %264 = vmatprep.subr.mxu0 0.0
  %265 = vmatpush1.msra.mxu0 0.0
  %266 = vmatprep.subr.mxu0 0.0
  %267 = vmatpush1.msra.mxu0 0.0
  %268 = vmatprep.subr.mxu0 0.0
  %269 = vmatpush1.msra.mxu0 0.0
  %270 = vmatprep.mubr.f32.mxu0 0.0
  %271 = vmatmul.mubr.f32.gmra.mrb[0].mxu0 %v118
  %v272 = vpop.f32.mrb[0].mxu0
  %v273 = vadd.f32 0.0, %v272
  %v274 = vpop.f32.mrb[0].mxu0
  %275 = vmatprep.mubr.f32.mxu0 0.0
  %276 = vmatmul.mubr.f32.gmra.mrb[0].mxu0 %v121
  %v277 = vpop.f32.mrb[0].mxu0
  %v278 = vadd.f32 0.0, %v277
  %v279 = vpop.f32.mrb[0].mxu0
  %280 = vdwg.mxu0
  %v281 = vmul.f32 %v273, %v113
  %v282 = vmul.f32 %v278, %v113
  %v284 = vsel %vm104, %v90, 0
  %286 = vmatprep.subr.mxu0 0.0
  %287 = vmatpush1.msra.mxu0 %v284
  %288 = vmatprep.subr.mxu0 0.0
  %289 = vmatpush1.msra.mxu0 0.0
  %290 = vmatprep.subr.mxu0 0.0
  %291 = vmatpush1.msra.mxu0 0.0
  %292 = vmatprep.subr.mxu0 0.0
  %293 = vmatpush1.msra.mxu0 0.0
  %294 = vmatprep.subr.mxu0 0.0
  %295 = vmatpush1.msra.mxu0 0.0
  %296 = vmatprep.subr.mxu0 0.0
  %297 = vmatpush1.msra.mxu0 0.0
  %298 = vmatprep.subr.mxu0 0.0
  %299 = vmatpush1.msra.mxu0 0.0
  %300 = vmatprep.subr.mxu0 0.0
  %301 = vmatpush1.msra.mxu0 0.0
  %302 = vmatprep.subr.mxu0 0.0
  %303 = vmatpush1.msra.mxu0 0.0
  %304 = vmatprep.subr.mxu0 0.0
  %305 = vmatpush1.msra.mxu0 0.0
  %306 = vmatprep.subr.mxu0 0.0
  %307 = vmatpush1.msra.mxu0 0.0
  %308 = vmatprep.subr.mxu0 0.0
  %309 = vmatpush1.msra.mxu0 0.0
  %310 = vmatprep.subr.mxu0 0.0
  %311 = vmatpush1.msra.mxu0 0.0
  %312 = vmatprep.subr.mxu0 0.0
  %313 = vmatpush1.msra.mxu0 0.0
  %314 = vmatprep.subr.mxu0 0.0
  %315 = vmatpush1.msra.mxu0 0.0
  %316 = vmatprep.subr.mxu0 0.0
  %317 = vmatpush1.msra.mxu0 0.0
  %318 = vmatprep.subr.mxu0 0.0
  %319 = vmatpush1.msra.mxu0 0.0
  %320 = vmatprep.subr.mxu0 0.0
  %321 = vmatpush1.msra.mxu0 0.0
  %322 = vmatprep.subr.mxu0 0.0
  %323 = vmatpush1.msra.mxu0 0.0
  %324 = vmatprep.subr.mxu0 0.0
  %325 = vmatpush1.msra.mxu0 0.0
  %326 = vmatprep.subr.mxu0 0.0
  %327 = vmatpush1.msra.mxu0 0.0
  %328 = vmatprep.subr.mxu0 0.0
  %329 = vmatpush1.msra.mxu0 0.0
  %330 = vmatprep.subr.mxu0 0.0
  %331 = vmatpush1.msra.mxu0 0.0
  %332 = vmatprep.subr.mxu0 0.0
  %333 = vmatpush1.msra.mxu0 0.0
  %334 = vmatprep.subr.mxu0 0.0
  %335 = vmatpush1.msra.mxu0 0.0
  %336 = vmatprep.subr.mxu0 0.0
  %337 = vmatpush1.msra.mxu0 0.0
  %338 = vmatprep.subr.mxu0 0.0
  %339 = vmatpush1.msra.mxu0 0.0
  %340 = vmatprep.subr.mxu0 0.0
  %341 = vmatpush1.msra.mxu0 0.0
  %342 = vmatprep.subr.mxu0 0.0
  %343 = vmatpush1.msra.mxu0 0.0
  %344 = vmatprep.subr.mxu0 0.0
  %345 = vmatpush1.msra.mxu0 0.0
  %346 = vmatprep.subr.mxu0 0.0
  %347 = vmatpush1.msra.mxu0 0.0
  %348 = vmatprep.subr.mxu0 0.0
  %349 = vmatpush1.msra.mxu0 0.0
  %350 = vmatprep.mubr.f32.mxu0 0.0
  %351 = vmatmul.mubr.f32.gmra.mrb[0].mxu0 %v118
  %v352 = vpop.f32.mrb[0].mxu0
  %v353 = vadd.f32 0.0, %v352
  %v354 = vpop.f32.mrb[0].mxu0
  %355 = vmatprep.mubr.f32.mxu0 0.0
  %356 = vmatmul.mubr.f32.gmra.mrb[0].mxu0 %v121
  %v357 = vpop.f32.mrb[0].mxu0
  %v358 = vadd.f32 0.0, %v357
  %v359 = vpop.f32.mrb[0].mxu0
  %360 = vdwg.mxu0
  %v361 = vmul.f32 %v353, %v113
  %v362 = vmul.f32 %v358, %v113
  %v363 = vmul.f32 %v201, %v201
  %v364 = vmul.f32 %v281, %v281
  %v365 = vadd.f32 %v363, %v364
  %v366 = vmul.f32 %v361, %v361
  %v367 = vadd.f32 %v365, %v366
  %v368 = vadd.f32 %v367, 1e-12
  %v369 = vrsqrt.pop %v368
  %v370 = vmul.f32 %v368, %v369
  %vm371 = vcmp.eq.f32.partialorder %v368, inf
  %v372 = vsel %vm371, %v368, %v370
  %vm373 = vcmp.eq.f32.partialorder %v368, 0.0
  %v374 = vand.u32 %v368, 2147483648
  %v375 = vsel %vm373, %v374, %v372
  %v376 = vmul.f32 %v375, 0.1
  %v377 = vld [vmem:[%s5] sm:$0xff]
  %v378 = vld [vmem:[%s5 + $0x8] sm:$0xff]
  %v379 = vld [vmem:[%s5 + $0x10] sm:$0xff]
  %v380 = vld [vmem:[%s5 + $0x18] sm:$0xff]
  %v381 = vld [vmem:[%s6] sm:$0xff]
  %v382 = vld [vmem:[%s6 + $0x8] sm:$0xff]
  %v383 = vld [vmem:[%s6 + $0x10] sm:$0xff]
  %v384 = vld [vmem:[%s6 + $0x18] sm:$0xff]
  %vm385 = vcmask 64512
  %v387 = vsel %vm385, %v381, 0
  %v390 = vsel %vm385, %v382, 0
  %v393 = vsel %vm385, %v383, 0
  %v396 = vsel %vm385, %v384, 0
  %398 = vmatprep.subr.mxu0 0.0
  %399 = vmatpush1.msra.mxu0 %v376
  %400 = vmatprep.subr.mxu0 0.0
  %401 = vmatpush1.msra.mxu0 0.0
  %402 = vmatprep.subr.mxu0 0.0
  %403 = vmatpush1.msra.mxu0 0.0
  %404 = vmatprep.subr.mxu0 0.0
  %405 = vmatpush1.msra.mxu0 0.0
  %406 = vmatprep.subr.mxu0 0.0
  %407 = vmatpush1.msra.mxu0 0.0
  %408 = vmatprep.subr.mxu0 0.0
  %409 = vmatpush1.msra.mxu0 0.0
  %410 = vmatprep.subr.mxu0 0.0
  %411 = vmatpush1.msra.mxu0 0.0
  %412 = vmatprep.subr.mxu0 0.0
  %413 = vmatpush1.msra.mxu0 0.0
  %414 = vmatprep.subr.mxu0 0.0
  %415 = vmatpush1.msra.mxu0 0.0
  %416 = vmatprep.subr.mxu0 0.0
  %417 = vmatpush1.msra.mxu0 0.0
  %418 = vmatprep.subr.mxu0 0.0
  %419 = vmatpush1.msra.mxu0 0.0
  %420 = vmatprep.subr.mxu0 0.0
  %421 = vmatpush1.msra.mxu0 0.0
  %422 = vmatprep.subr.mxu0 0.0
  %423 = vmatpush1.msra.mxu0 0.0
  %424 = vmatprep.subr.mxu0 0.0
  %425 = vmatpush1.msra.mxu0 0.0
  %426 = vmatprep.subr.mxu0 0.0
  %427 = vmatpush1.msra.mxu0 0.0
  %428 = vmatprep.subr.mxu0 0.0
  %429 = vmatpush1.msra.mxu0 0.0
  %430 = vmatprep.subr.mxu0 0.0
  %431 = vmatpush1.msra.mxu0 0.0
  %432 = vmatprep.subr.mxu0 0.0
  %433 = vmatpush1.msra.mxu0 0.0
  %434 = vmatprep.subr.mxu0 0.0
  %435 = vmatpush1.msra.mxu0 0.0
  %436 = vmatprep.subr.mxu0 0.0
  %437 = vmatpush1.msra.mxu0 0.0
  %438 = vmatprep.subr.mxu0 0.0
  %439 = vmatpush1.msra.mxu0 0.0
  %440 = vmatprep.subr.mxu0 0.0
  %441 = vmatpush1.msra.mxu0 0.0
  %442 = vmatprep.subr.mxu0 0.0
  %443 = vmatpush1.msra.mxu0 0.0
  %444 = vmatprep.subr.mxu0 0.0
  %445 = vmatpush1.msra.mxu0 0.0
  %446 = vmatprep.subr.mxu0 0.0
  %447 = vmatpush1.msra.mxu0 0.0
  %448 = vmatprep.subr.mxu0 0.0
  %449 = vmatpush1.msra.mxu0 0.0
  %450 = vmatprep.subr.mxu0 0.0
  %451 = vmatpush1.msra.mxu0 0.0
  %452 = vmatprep.subr.mxu0 0.0
  %453 = vmatpush1.msra.mxu0 0.0
  %454 = vmatprep.subr.mxu0 0.0
  %455 = vmatpush1.msra.mxu0 0.0
  %456 = vmatprep.subr.mxu0 0.0
  %457 = vmatpush1.msra.mxu0 0.0
  %458 = vmatprep.subr.mxu0 0.0
  %459 = vmatpush1.msra.mxu0 0.0
  %460 = vmatprep.subr.mxu0 0.0
  %461 = vmatpush1.msra.mxu0 0.0
  %462 = vmatprep.mubr.f32.mxu0 0.0
  %463 = vmatmul.mubr.f32.gmra.mrb[0].mxu0 %v387
  %v464 = vpop.f32.mrb[0].mxu0
  %v465 = vadd.f32 0.0, %v464
  %v466 = vpop.f32.mrb[0].mxu0
  %467 = vmatprep.mubr.f32.mxu0 0.0
  %468 = vmatmul.mubr.f32.gmra.mrb[0].mxu0 %v390
  %v469 = vpop.f32.mrb[0].mxu0
  %v470 = vadd.f32 0.0, %v469
  %v471 = vpop.f32.mrb[0].mxu0
  %472 = vmatprep.mubr.f32.mxu0 0.0
  %473 = vmatmul.mubr.f32.gmra.mrb[0].mxu0 %v393
  %v474 = vpop.f32.mrb[0].mxu0
  %v475 = vadd.f32 0.0, %v474
  %v476 = vpop.f32.mrb[0].mxu0
  %477 = vmatprep.mubr.f32.mxu0 0.0
  %478 = vmatmul.mubr.f32.gmra.mrb[0].mxu0 %v396
  %v479 = vpop.f32.mrb[0].mxu0
  %v480 = vadd.f32 0.0, %v479
  %v481 = vpop.f32.mrb[0].mxu0
  %482 = vdwg.mxu0
  %vm483 = vcmask 130048
  %v485 = vsel %vm483, %v377, 0
  %v488 = vsel %vm483, %v378, 0
  %v491 = vsel %vm483, %v379, 0
  %v494 = vsel %vm483, %v380, 0
  %496 = vmatprep.subr.mxu0 0.0
  %497 = vmatpush1.msra.mxu0 %v84
  %498 = vmatprep.subr.mxu0 0.0
  %499 = vmatpush1.msra.mxu0 %v85
  %500 = vmatprep.subr.mxu0 0.0
  %501 = vmatpush1.msra.mxu0 0.0
  %502 = vmatprep.subr.mxu0 0.0
  %503 = vmatpush1.msra.mxu0 0.0
  %504 = vmatprep.subr.mxu0 0.0
  %505 = vmatpush1.msra.mxu0 0.0
  %506 = vmatprep.subr.mxu0 0.0
  %507 = vmatpush1.msra.mxu0 0.0
  %508 = vmatprep.subr.mxu0 0.0
  %509 = vmatpush1.msra.mxu0 0.0
  %510 = vmatprep.subr.mxu0 0.0
  %511 = vmatpush1.msra.mxu0 0.0
  %512 = vmatprep.subr.mxu0 0.0
  %513 = vmatpush1.msra.mxu0 0.0
  %514 = vmatprep.subr.mxu0 0.0
  %515 = vmatpush1.msra.mxu0 0.0
  %516 = vmatprep.subr.mxu0 0.0
  %517 = vmatpush1.msra.mxu0 0.0
  %518 = vmatprep.subr.mxu0 0.0
  %519 = vmatpush1.msra.mxu0 0.0
  %520 = vmatprep.subr.mxu0 0.0
  %521 = vmatpush1.msra.mxu0 0.0
  %522 = vmatprep.subr.mxu0 0.0
  %523 = vmatpush1.msra.mxu0 0.0
  %524 = vmatprep.subr.mxu0 0.0
  %525 = vmatpush1.msra.mxu0 0.0
  %526 = vmatprep.subr.mxu0 0.0
  %527 = vmatpush1.msra.mxu0 0.0
  %528 = vmatprep.subr.mxu0 0.0
  %529 = vmatpush1.msra.mxu0 0.0
  %530 = vmatprep.subr.mxu0 0.0
  %531 = vmatpush1.msra.mxu0 0.0
  %532 = vmatprep.subr.mxu0 0.0
  %533 = vmatpush1.msra.mxu0 0.0
  %534 = vmatprep.subr.mxu0 0.0
  %535 = vmatpush1.msra.mxu0 0.0
  %536 = vmatprep.subr.mxu0 0.0
  %537 = vmatpush1.msra.mxu0 0.0
  %538 = vmatprep.subr.mxu0 0.0
  %539 = vmatpush1.msra.mxu0 0.0
  %540 = vmatprep.subr.mxu0 0.0
  %541 = vmatpush1.msra.mxu0 0.0
  %542 = vmatprep.subr.mxu0 0.0
  %543 = vmatpush1.msra.mxu0 0.0
  %544 = vmatprep.subr.mxu0 0.0
  %545 = vmatpush1.msra.mxu0 0.0
  %546 = vmatprep.subr.mxu0 0.0
  %547 = vmatpush1.msra.mxu0 0.0
  %548 = vmatprep.subr.mxu0 0.0
  %549 = vmatpush1.msra.mxu0 0.0
  %550 = vmatprep.subr.mxu0 0.0
  %551 = vmatpush1.msra.mxu0 0.0
  %552 = vmatprep.subr.mxu0 0.0
  %553 = vmatpush1.msra.mxu0 0.0
  %554 = vmatprep.subr.mxu0 0.0
  %555 = vmatpush1.msra.mxu0 0.0
  %556 = vmatprep.subr.mxu0 0.0
  %557 = vmatpush1.msra.mxu0 0.0
  %558 = vmatprep.subr.mxu0 0.0
  %559 = vmatpush1.msra.mxu0 0.0
  %560 = vmatprep.mubr.f32.mxu0 0.0
  %561 = vmatmul.mubr.f32.gmra.mrb[0].mxu0 %v485
  %v562 = vpop.f32.mrb[0].mxu0
  %v563 = vadd.f32 %v465, %v562
  %v564 = vpop.f32.mrb[0].mxu0
  %565 = vmatprep.mubr.f32.mxu0 0.0
  %566 = vmatmul.mubr.f32.gmra.mrb[0].mxu0 %v488
  %v567 = vpop.f32.mrb[0].mxu0
  %v568 = vadd.f32 %v470, %v567
  %v569 = vpop.f32.mrb[0].mxu0
  %570 = vmatprep.mubr.f32.mxu0 0.0
  %571 = vmatmul.mubr.f32.gmra.mrb[0].mxu0 %v491
  %v572 = vpop.f32.mrb[0].mxu0
  %v573 = vadd.f32 %v475, %v572
  %v574 = vpop.f32.mrb[0].mxu0
  %575 = vmatprep.mubr.f32.mxu0 0.0
  %576 = vmatmul.mubr.f32.gmra.mrb[0].mxu0 %v494
  %v577 = vpop.f32.mrb[0].mxu0
  %v578 = vadd.f32 %v480, %v577
  %v579 = vpop.f32.mrb[0].mxu0
  %580 = vdwg.mxu0
  %v581 = vld [vmem:[%s7] sm:$0xff]
  %v582 = vld [vmem:[%s7 + $0x8] sm:$0xff]
  %v583 = vld [vmem:[%s7 + $0x10] sm:$0xff]
  %v584 = vld [vmem:[%s7 + $0x18] sm:$0xff]
  %586 = vset.pattern.permute.xlu0 0
  %587 = vperm.xlu0 %586, %v581
  %v588 = vpop.permute.xlu0 %587
  %591 = vset.pattern.permute.xlu0 0
  %592 = vperm.xlu0 %591, %v582
  %v593 = vpop.permute.xlu0 %592
  %596 = vset.pattern.permute.xlu0 0
  %597 = vperm.xlu0 %596, %v583
  %v598 = vpop.permute.xlu0 %597
  %601 = vset.pattern.permute.xlu0 0
  %602 = vperm.xlu0 %601, %v584
  %v603 = vpop.permute.xlu0 %602
  %v605 = vadd.f32 %v563, %v588
  %v606 = vadd.f32 %v568, %v593
  %v607 = vadd.f32 %v573, %v598
  %v608 = vadd.f32 %v578, %v603
  %v609 = vmax.f32 %v605, 0.0
  %v610 = vmax.f32 %v606, 0.0
  %v611 = vmax.f32 %v607, 0.0
  %v612 = vmax.f32 %v608, 0.0
  %613 = vst [vmem:[%s8] sm:$0xff] %v609
  %614 = vst [vmem:[%s8 + $0x8] sm:$0xff] %v610
  %615 = vst [vmem:[%s8 + $0x10] sm:$0xff] %v611
  %616 = vst [vmem:[%s8 + $0x18] sm:$0xff] %v612
  %v617 = vmul.f32 %v202, %v202
  %v618 = vmul.f32 %v282, %v282
  %v619 = vadd.f32 %v617, %v618
  %v620 = vmul.f32 %v362, %v362
  %v621 = vadd.f32 %v619, %v620
  %v622 = vadd.f32 %v621, 1e-12
  %v623 = vrsqrt.pop %v622
  %v624 = vmul.f32 %v622, %v623
  %vm625 = vcmp.eq.f32.partialorder %v622, inf
  %v626 = vsel %vm625, %v622, %v624
  %vm627 = vcmp.eq.f32.partialorder %v622, 0.0
  %v628 = vand.u32 %v622, 2147483648
  %v629 = vsel %vm627, %v628, %v626
  %v630 = vmul.f32 %v629, %v202
  %631 = vst [vmem:[%s9] sm:$0xff] %v630
  %v632 = vmul.f32 %v629, %v282
  %s633 = scalar_lea.vmem %s9, 8
  %634 = vst [vmem:[%s633] sm:$0xff] %v632
  %v635 = vmul.f32 %v629, %v362
  %s636 = scalar_lea.vmem %s9, 16
  %637 = vst [vmem:[%s636] sm:$0xff] %v635
  // Predicated region
  $region34: #{gvp_feed_forward_block.1} parent=0 // pred_check
    _
  $region35: #{gvp_feed_forward_block.1} parent=0 // pred_check_branch
    %639 = sbr.rel (0) target = $region37
  $region36: #{gvp_feed_forward_block.1} parent=0 // pred_region
    _
  $region37: #{gvp_feed_forward_block.1} parent=0 // pred_fallthru
    _
  // Predicated region
  $region38: #{gvp_feed_forward_block.1} parent=0 // pred_check
    _
  $region39: #{gvp_feed_forward_block.1} parent=0 // pred_check_branch
    %641 = sbr.rel (0) target = $region41
  $region40: #{gvp_feed_forward_block.1} parent=0 // pred_region
    _
  $region41: #{gvp_feed_forward_block.1} parent=0 // pred_fallthru
    _
  // Predicated region
  $region42: #{gvp_feed_forward_block.1} parent=0 // pred_check
    _
  $region43: #{gvp_feed_forward_block.1} parent=0 // pred_check_branch
    %643 = sbr.rel (0) target = $region45
  $region44: #{gvp_feed_forward_block.1} parent=0 // pred_region
    _
  $region45: #{gvp_feed_forward_block.1} parent=0 // pred_fallthru
    _
  // Predicated region
  $region46: #{gvp_feed_forward_block.1} parent=0 // pred_check
    _
  $region47: #{gvp_feed_forward_block.1} parent=0 // pred_check_branch
    %645 = sbr.rel (0) target = $region49
  $region48: #{gvp_feed_forward_block.1} parent=0 // pred_region
    _
  $region49: #{gvp_feed_forward_block.1} parent=0 // pred_fallthru
    _

</llo_original>
